<compile_context>
chip_gen: v7x
topology: tpu7x:2x2x1
jax: 0.10.0
libtpu: 0.0.40
codegen_flags: <defaults>
</compile_context>

<pallas_src>
import functools

import numpy as np
import jax
import jax.numpy as jnp
from jax import lax
from jax.experimental import pallas as pl
from jax.experimental.pallas import tpu as pltpu


def conv_block_kernel(xe_ref, xo_ref, w_ref, b_ref, scale_ref, shift_ref, o_ref,
                      *, K, Lh, L_pool, l_out_odd):
    """One grid step = one batch tile (TN samples flattened into the lane axis).

    xe_ref / xo_ref : (Cin, Wp)      bf16  even / odd input positions, per-sample lane stride Lh
    w_ref           : (K, Cout, Cin) bf16  conv taps
    b_ref           : (Cout, 1)      f32   conv bias
    scale_ref       : (Cout, 1)      f32   0.5 * gamma / sqrt(var + eps)   (pool 1/2 folded in)
    shift_ref       : (Cout, 1)      f32   beta - mean * gamma / sqrt(var + eps)
    o_ref           : (Cout, Wv)     f32   pooled slab (per-sample stride Lh, first L_pool valid)
    """
    Cout, Wv = o_ref.shape

    acc_e = jnp.zeros((Cout, Wv), jnp.float32)   # conv outputs at even positions (pre-ReLU)
    acc_o = jnp.zeros((Cout, Wv), jnp.float32)   # conv outputs at odd positions  (pre-ReLU)

    # Conv1d (stride 1, zero padding done in the wrapper) as K accumulated MXU matmuls over the
    # raw (non-im2col) input.  Even/odd output split makes AvgPool(2,2) a pure element-wise add.
    for k in range(K):
        wk = w_ref[k]                                         # (Cout, Cin) bf16
        if k % 2 == 0:
            he, ho = xe_ref, xo_ref
        else:
            he, ho = xo_ref, xe_ref
        se = k // 2                                           # lane shift for even outputs
        so = (k + 1) // 2                                     # lane shift for odd outputs
        acc_e = acc_e + jnp.dot(wk, he[:, se:se + Wv], preferred_element_type=jnp.float32)
        acc_o = acc_o + jnp.dot(wk, ho[:, so:so + Wv], preferred_element_type=jnp.float32)

    b = b_ref[...]                                            # (Cout, 1) f32
    ye = jnp.maximum(acc_e + b, 0.0)                          # ReLU(conv + bias), even positions
    yo = jnp.maximum(acc_o + b, 0.0)                          # ReLU(conv + bias), odd positions

    if l_out_odd:
        # ReplicationPad1d((0, 1)): the last window of each sample averages the last valid
        # element with itself -> replace the (invalid) odd contribution by the even one.
        j = lax.broadcasted_iota(jnp.int32, (1, Wv), 1) % Lh
        yo = jnp.where(j == (L_pool - 1), ye, yo)

    pooled = ye + yo                                          # AvgPool sum; 1/2 folded into scale
    # Eval-mode BatchNorm1d affine applied after pooling (pooling weights sum to 1).
    o_ref[...] = (scale_ref[...] * pooled + shift_ref[...]).astype(o_ref.dtype)


def conv_block_forward(x, w, b, gamma, beta, run_mean, run_var, *,
                       conv_stride=1, conv_padding=1, pool_size=2, pool_stride=2,
                       eps=0.001, tn=None):
    assert conv_stride == 1 and pool_size == 2 and pool_stride == 2, \
        "kernel specialised for conv_stride=1, pool_size=pool_stride=2 (the ConvBlock config)"
    N, Cin, L = x.shape
    Cout, _, K = w.shape

    L_pad = L + 2 * conv_padding
    L_out = L_pad - K + 1
    L_pool = (L_out - 1) // pool_stride + 1            # ReplicationPad(0,1) + AvgPool(2,2)
    L_pad2 = L_pad + (L_pad % 2)                       # even length for the even/odd split
    Lh = L_pad2 // 2                                   # per-sample stride of the half slabs

    # ---- glue: zero padding (padding_mode='zeros') + even/odd de-interleave ----
    x_pad = jnp.pad(x, ((0, 0), (0, 0), (conv_padding, conv_padding + (L_pad2 - L_pad))))
    xe = x_pad[:, :, 0::2]                             # (N, Cin, Lh) even input positions
    xo = x_pad[:, :, 1::2]                             # (N, Cin, Lh) odd  input positions

    # ---- glue: batch tiling -> lane-dense slabs (Cin, TN*Lh) per grid step ----
    if tn is None:
        tn = max(1, min(N, max(1, 2048 // Lh)))        # aim for ~2k-lane slabs per grid step
    num_tiles = (N + tn - 1) // tn
    Np = num_tiles * tn
    if Np != N:
        xe = jnp.pad(xe, ((0, Np - N), (0, 0), (0, 0)))
        xo = jnp.pad(xo, ((0, Np - N), (0, 0), (0, 0)))
    Wv = tn * Lh                                       # valid lane width per tile
    Wp = Wv + max(K // 2, 1)                           # room for in-kernel shifted lane reads

    def to_slab(a):                                    # (Np, Cin, Lh) -> (num_tiles, Cin, Wp) bf16
        a = a.reshape(num_tiles, tn, Cin, Lh).transpose(0, 2, 1, 3).reshape(num_tiles, Cin, Wv)
        a = jnp.pad(a, ((0, 0), (0, 0), (0, Wp - Wv)))
        return a.astype(jnp.bfloat16)

    xe_t = to_slab(xe)
    xo_t = to_slab(xo)
    w_taps = jnp.transpose(w, (2, 0, 1)).astype(jnp.bfloat16)   # (K, Cout, Cin)

    # ---- glue: fold eval-mode BN (running stats) and the 1/pool_size factor ----
    scale = gamma / jnp.sqrt(run_var + eps)
    shift = beta - run_mean * scale
    b2 = b.reshape(Cout, 1).astype(jnp.float32)
    sc2 = (0.5 * scale).reshape(Cout, 1).astype(jnp.float32)
    sh2 = shift.reshape(Cout, 1).astype(jnp.float32)

    kernel = functools.partial(conv_block_kernel, K=K, Lh=Lh, L_pool=L_pool,
                               l_out_odd=bool(L_out % 2))

    out = pl.pallas_call(
        kernel,
        out_shape=jax.ShapeDtypeStruct((num_tiles, Cout, Wv), jnp.float32),
        grid=(num_tiles,),
        in_specs=[
            pl.BlockSpec((None, Cin, Wp), lambda n: (n, 0, 0)),
            pl.BlockSpec((None, Cin, Wp), lambda n: (n, 0, 0)),
            pl.BlockSpec((K, Cout, Cin), lambda n: (0, 0, 0)),
            pl.BlockSpec((Cout, 1), lambda n: (0, 0)),
            pl.BlockSpec((Cout, 1), lambda n: (0, 0)),
            pl.BlockSpec((Cout, 1), lambda n: (0, 0)),
        ],
        out_specs=pl.BlockSpec((None, Cout, Wv), lambda n: (n, 0, 0)),
        compiler_params=pltpu.CompilerParams(
            dimension_semantics=("parallel",),
            vmem_limit_bytes=48 * 1024 * 1024),
    )(xe_t, xo_t, w_taps, b2, sc2, sh2)

    # ---- glue: un-flatten the lane axis, trim batch padding and garbage columns ----
    out = out.reshape(num_tiles, Cout, tn, Lh).transpose(0, 2, 1, 3).reshape(Np, Cout, Lh)
    return out[:N, :, :L_pool]


def conv_block_reference(x, w, b, gamma, beta, run_mean, run_var, *,
                         conv_stride=1, conv_padding=1, pool_size=2, pool_stride=2, eps=0.001):
    """Pure-JAX reference mirroring the PyTorch forward (eval-mode BN)."""
    y = lax.conv_general_dilated(
        x, w, window_strides=(conv_stride,),
        padding=[(conv_padding, conv_padding)],
        dimension_numbers=("NCH", "OIH", "NCH"))
    y = y + b[None, :, None]
    y = jnp.maximum(y, 0.0)
    scale = gamma / jnp.sqrt(run_var + eps)
    shift = beta - run_mean * scale
    y = y * scale[None, :, None] + shift[None, :, None]
    # ReplicationPad1d((0, pool_size-1)) then AvgPool1d(pool_size, pool_stride)
    y_pad = jnp.concatenate([y, jnp.repeat(y[:, :, -1:], pool_size - 1, axis=2)], axis=2)
    L_pad = y_pad.shape[-1]
    L_pool = (L_pad - pool_size) // pool_stride + 1
    pooled = jnp.stack(
        [y_pad[:, :, l * pool_stride: l * pool_stride + pool_size].mean(axis=-1)
         for l in range(L_pool)], axis=-1)
    return pooled


def _run_case(key, N, Cin, L, Cout, K):
    k_x, k_w, k_b, k_g, k_be, k_m, k_v = jax.random.split(key, 7)
    x = jax.random.normal(k_x, (N, Cin, L), dtype=jnp.float32)
    w = jax.random.normal(k_w, (Cout, Cin, K), dtype=jnp.float32) * 0.1
    b = jax.random.normal(k_b, (Cout,), dtype=jnp.float32) * 0.1
    gamma = 1.0 + 0.1 * jax.random.normal(k_g, (Cout,), dtype=jnp.float32)
    beta = 0.1 * jax.random.normal(k_be, (Cout,), dtype=jnp.float32)
    run_mean = 0.1 * jax.random.normal(k_m, (Cout,), dtype=jnp.float32)
    run_var = 1.0 + 0.1 * jnp.abs(jax.random.normal(k_v, (Cout,), dtype=jnp.float32))

    out = conv_block_forward(x, w, b, gamma, beta, run_mean, run_var,
                             conv_stride=1, conv_padding=1, pool_size=2, pool_stride=2)
    out = jax.block_until_ready(out)
    ref = conv_block_reference(x, w, b, gamma, beta, run_mean, run_var,
                               conv_stride=1, conv_padding=1, pool_size=2, pool_stride=2)
    ref = jax.block_until_ready(ref)
    # bf16 matmul inputs with f32 accumulation -> slightly loosened tolerances.
    np.testing.assert_allclose(np.asarray(out), np.asarray(ref), rtol=2e-2, atol=2e-2)


if __name__ == "__main__":
    N, Cin, L = 2, 4, 16
    Cout, K = 8, 3

    key0, key1 = jax.random.split(jax.random.PRNGKey(0), 2)
    _run_case(key0, N, Cin, L, Cout, K)        # even L_out (no replication clamp)
    _run_case(key1, N, Cin, L - 1, Cout, K)    # odd L_out (exercises the replication-pad path)
    print("KERNEL_OK")
</pallas_src>

<mosaic_0001>
module attributes {stable_mosaic.version = 11 : i64} {
  func.func @conv_block_kernel(%arg0: i32, %arg1: memref<1x4x19xbf16, #tpu.memory_space<vmem>>, %arg2: memref<1x4x19xbf16, #tpu.memory_space<vmem>>, %arg3: memref<3x8x4xbf16, #tpu.memory_space<vmem>>, %arg4: memref<8x1xf32, #tpu.memory_space<vmem>>, %arg5: memref<8x1xf32, #tpu.memory_space<vmem>>, %arg6: memref<8x1xf32, #tpu.memory_space<vmem>>, %arg7: memref<1x8x18xf32, #tpu.memory_space<vmem>>) attributes {dimension_semantics = [#tpu.dimension_semantics<parallel>], iteration_bounds = array<i64: 1>, scalar_prefetch = 0 : i64, scratch_operands = 0 : i64, tpu.core_type = #tpu.core_type<tc>, window_params = [{transform_indices = @transform_0, window_bounds = array<i64: 1, 4, 19>}, {transform_indices = @transform_1, window_bounds = array<i64: 1, 4, 19>}, {pipeline_mode = #tpu.pipeline_mode<synchronous>, transform_indices = @transform_2, window_bounds = array<i64: 3, 8, 4>}, {pipeline_mode = #tpu.pipeline_mode<synchronous>, transform_indices = @transform_3, window_bounds = array<i64: 8, 1>}, {pipeline_mode = #tpu.pipeline_mode<synchronous>, transform_indices = @transform_4, window_bounds = array<i64: 8, 1>}, {pipeline_mode = #tpu.pipeline_mode<synchronous>, transform_indices = @transform_5, window_bounds = array<i64: 8, 1>}, {transform_indices = @transform_6, window_bounds = array<i64: 1, 8, 18>}]} {
    %cst = arith.constant 0.000000e+00 : f32
    %0 = vector.broadcast %cst : f32 to vector<8x18xf32>
    %cst_0 = arith.constant 0.000000e+00 : f32
    %1 = vector.broadcast %cst_0 : f32 to vector<8x18xf32>
    %c0 = arith.constant 0 : index
    %c0_1 = arith.constant 0 : index
    %c0_2 = arith.constant 0 : index
    %2 = vector.load %arg3[%c0, %c0_1, %c0_2] : memref<3x8x4xbf16, #tpu.memory_space<vmem>>, vector<1x8x4xbf16>
    %3 = vector.shape_cast %2 : vector<1x8x4xbf16> to vector<8x4xbf16>
    %c0_3 = arith.constant 0 : index
    %c0_4 = arith.constant 0 : index
    %c0_5 = arith.constant 0 : index
    %4 = vector.load %arg1[%c0_3, %c0_4, %c0_5] : memref<1x4x19xbf16, #tpu.memory_space<vmem>>, vector<1x4x18xbf16>
    %5 = vector.shape_cast %4 : vector<1x4x18xbf16> to vector<4x18xbf16>
    %cst_6 = arith.constant dense<0.000000e+00> : vector<8x18xf32>
    %6 = tpu.matmul %3, %5, %cst_6 {dimension_numbers = #tpu.dot_dimension_numbers<[1], [0], [0], [1], [0, 0, 1, 1], [], []>} : vector<8x4xbf16>, vector<4x18xbf16>, vector<8x18xf32> -> vector<8x18xf32>
    %7 = arith.addf %0, %6 : vector<8x18xf32>
    %c0_7 = arith.constant 0 : index
    %c0_8 = arith.constant 0 : index
    %c0_9 = arith.constant 0 : index
    %8 = vector.load %arg2[%c0_7, %c0_8, %c0_9] : memref<1x4x19xbf16, #tpu.memory_space<vmem>>, vector<1x4x18xbf16>
    %9 = vector.shape_cast %8 : vector<1x4x18xbf16> to vector<4x18xbf16>
    %cst_10 = arith.constant dense<0.000000e+00> : vector<8x18xf32>
    %10 = tpu.matmul %3, %9, %cst_10 {dimension_numbers = #tpu.dot_dimension_numbers<[1], [0], [0], [1], [0, 0, 1, 1], [], []>} : vector<8x4xbf16>, vector<4x18xbf16>, vector<8x18xf32> -> vector<8x18xf32>
    %11 = arith.addf %1, %10 : vector<8x18xf32>
    %c1 = arith.constant 1 : index
    %c0_11 = arith.constant 0 : index
    %c0_12 = arith.constant 0 : index
    %12 = vector.load %arg3[%c1, %c0_11, %c0_12] : memref<3x8x4xbf16, #tpu.memory_space<vmem>>, vector<1x8x4xbf16>
    %13 = vector.shape_cast %12 : vector<1x8x4xbf16> to vector<8x4xbf16>
    %c0_13 = arith.constant 0 : index
    %c0_14 = arith.constant 0 : index
    %c0_15 = arith.constant 0 : index
    %14 = vector.load %arg2[%c0_13, %c0_14, %c0_15] : memref<1x4x19xbf16, #tpu.memory_space<vmem>>, vector<1x4x18xbf16>
    %15 = vector.shape_cast %14 : vector<1x4x18xbf16> to vector<4x18xbf16>
    %cst_16 = arith.constant dense<0.000000e+00> : vector<8x18xf32>
    %16 = tpu.matmul %13, %15, %cst_16 {dimension_numbers = #tpu.dot_dimension_numbers<[1], [0], [0], [1], [0, 0, 1, 1], [], []>} : vector<8x4xbf16>, vector<4x18xbf16>, vector<8x18xf32> -> vector<8x18xf32>
    %17 = arith.addf %7, %16 : vector<8x18xf32>
    %c0_17 = arith.constant 0 : index
    %c0_18 = arith.constant 0 : index
    %c1_19 = arith.constant 1 : index
    %18 = vector.load %arg1[%c0_17, %c0_18, %c1_19] : memref<1x4x19xbf16, #tpu.memory_space<vmem>>, vector<1x4x18xbf16>
    %19 = vector.shape_cast %18 : vector<1x4x18xbf16> to vector<4x18xbf16>
    %cst_20 = arith.constant dense<0.000000e+00> : vector<8x18xf32>
    %20 = tpu.matmul %13, %19, %cst_20 {dimension_numbers = #tpu.dot_dimension_numbers<[1], [0], [0], [1], [0, 0, 1, 1], [], []>} : vector<8x4xbf16>, vector<4x18xbf16>, vector<8x18xf32> -> vector<8x18xf32>
    %21 = arith.addf %11, %20 : vector<8x18xf32>
    %c2 = arith.constant 2 : index
    %c0_21 = arith.constant 0 : index
    %c0_22 = arith.constant 0 : index
    %22 = vector.load %arg3[%c2, %c0_21, %c0_22] : memref<3x8x4xbf16, #tpu.memory_space<vmem>>, vector<1x8x4xbf16>
    %23 = vector.shape_cast %22 : vector<1x8x4xbf16> to vector<8x4xbf16>
    %c0_23 = arith.constant 0 : index
    %c0_24 = arith.constant 0 : index
    %c1_25 = arith.constant 1 : index
    %24 = vector.load %arg1[%c0_23, %c0_24, %c1_25] : memref<1x4x19xbf16, #tpu.memory_space<vmem>>, vector<1x4x18xbf16>
    %25 = vector.shape_cast %24 : vector<1x4x18xbf16> to vector<4x18xbf16>
    %cst_26 = arith.constant dense<0.000000e+00> : vector<8x18xf32>
    %26 = tpu.matmul %23, %25, %cst_26 {dimension_numbers = #tpu.dot_dimension_numbers<[1], [0], [0], [1], [0, 0, 1, 1], [], []>} : vector<8x4xbf16>, vector<4x18xbf16>, vector<8x18xf32> -> vector<8x18xf32>
    %27 = arith.addf %17, %26 : vector<8x18xf32>
    %c0_27 = arith.constant 0 : index
    %c0_28 = arith.constant 0 : index
    %c1_29 = arith.constant 1 : index
    %28 = vector.load %arg2[%c0_27, %c0_28, %c1_29] : memref<1x4x19xbf16, #tpu.memory_space<vmem>>, vector<1x4x18xbf16>
    %29 = vector.shape_cast %28 : vector<1x4x18xbf16> to vector<4x18xbf16>
    %cst_30 = arith.constant dense<0.000000e+00> : vector<8x18xf32>
    %30 = tpu.matmul %23, %29, %cst_30 {dimension_numbers = #tpu.dot_dimension_numbers<[1], [0], [0], [1], [0, 0, 1, 1], [], []>} : vector<8x4xbf16>, vector<4x18xbf16>, vector<8x18xf32> -> vector<8x18xf32>
    %31 = arith.addf %21, %30 : vector<8x18xf32>
    %c0_31 = arith.constant 0 : index
    %c0_32 = arith.constant 0 : index
    %32 = vector.load %arg4[%c0_31, %c0_32] : memref<8x1xf32, #tpu.memory_space<vmem>>, vector<8x1xf32>
    %33 = vector.broadcast %32 : vector<8x1xf32> to vector<8x18xf32>
    %34 = arith.addf %27, %33 : vector<8x18xf32>
    %cst_33 = arith.constant 0.000000e+00 : f32
    %35 = vector.broadcast %cst_33 : f32 to vector<8x18xf32>
    %36 = arith.maximumf %34, %35 : vector<8x18xf32>
    %37 = vector.broadcast %32 : vector<8x1xf32> to vector<8x18xf32>
    %38 = arith.addf %31, %37 : vector<8x18xf32>
    %cst_34 = arith.constant 0.000000e+00 : f32
    %39 = vector.broadcast %cst_34 : f32 to vector<8x18xf32>
    %40 = arith.maximumf %38, %39 : vector<8x18xf32>
    %41 = arith.addf %36, %40 : vector<8x18xf32>
    %c0_35 = arith.constant 0 : index
    %c0_36 = arith.constant 0 : index
    %42 = vector.load %arg5[%c0_35, %c0_36] : memref<8x1xf32, #tpu.memory_space<vmem>>, vector<8x1xf32>
    %43 = vector.broadcast %42 : vector<8x1xf32> to vector<8x18xf32>
    %44 = arith.mulf %43, %41 : vector<8x18xf32>
    %c0_37 = arith.constant 0 : index
    %c0_38 = arith.constant 0 : index
    %45 = vector.load %arg6[%c0_37, %c0_38] : memref<8x1xf32, #tpu.memory_space<vmem>>, vector<8x1xf32>
    %46 = vector.broadcast %45 : vector<8x1xf32> to vector<8x18xf32>
    %47 = arith.addf %44, %46 : vector<8x18xf32>
    %c0_39 = arith.constant 0 : index
    %c0_40 = arith.constant 0 : index
    %c0_41 = arith.constant 0 : index
    %48 = vector.load %arg7[%c0_39, %c0_40, %c0_41] : memref<1x8x18xf32, #tpu.memory_space<vmem>>, vector<1x8x18xf32>
    %49 = vector.shape_cast %48 : vector<1x8x18xf32> to vector<8x18xf32>
    %50 = vector.shape_cast %47 : vector<8x18xf32> to vector<1x8x18xf32>
    tpu.vector_store %arg7[%c0_39, %c0_40, %c0_41], %50 {strides = array<i32>} : memref<1x8x18xf32, #tpu.memory_space<vmem>>, vector<1x8x18xf32>,
    return
  }
  func.func @transform_0(%arg0: i32) -> (i32, i32, i32) {
    %c0_i32 = arith.constant 0 : i32
    %c0_i32_0 = arith.constant 0 : i32
    %c0_i32_1 = arith.constant 0 : i32
    return %arg0, %c0_i32, %c0_i32_0 : i32, i32, i32
  }
  func.func @transform_1(%arg0: i32) -> (i32, i32, i32) {
    %c0_i32 = arith.constant 0 : i32
    %c0_i32_0 = arith.constant 0 : i32
    %c0_i32_1 = arith.constant 0 : i32
    return %arg0, %c0_i32, %c0_i32_0 : i32, i32, i32
  }
  func.func @transform_2(%arg0: i32) -> (i32, i32, i32) {
    %c0_i32 = arith.constant 0 : i32
    %c0_i32_0 = arith.constant 0 : i32
    %c0_i32_1 = arith.constant 0 : i32
    %c0_i32_2 = arith.constant 0 : i32
    return %c0_i32, %c0_i32_0, %c0_i32_1 : i32, i32, i32
  }
  func.func @transform_3(%arg0: i32) -> (i32, i32) {
    %c0_i32 = arith.constant 0 : i32
    %c0_i32_0 = arith.constant 0 : i32
    %c0_i32_1 = arith.constant 0 : i32
    return %c0_i32, %c0_i32_0 : i32, i32
  }
  func.func @transform_4(%arg0: i32) -> (i32, i32) {
    %c0_i32 = arith.constant 0 : i32
    %c0_i32_0 = arith.constant 0 : i32
    %c0_i32_1 = arith.constant 0 : i32
    return %c0_i32, %c0_i32_0 : i32, i32
  }
  func.func @transform_5(%arg0: i32) -> (i32, i32) {
    %c0_i32 = arith.constant 0 : i32
    %c0_i32_0 = arith.constant 0 : i32
    %c0_i32_1 = arith.constant 0 : i32
    return %c0_i32, %c0_i32_0 : i32, i32
  }
  func.func @transform_6(%arg0: i32) -> (i32, i32, i32) {
    %c0_i32 = arith.constant 0 : i32
    %c0_i32_0 = arith.constant 0 : i32
    %c0_i32_1 = arith.constant 0 : i32
    return %arg0, %c0_i32, %c0_i32_0 : i32, i32, i32
  }
}

</mosaic_0001>

<llo_original>
// kernel: tpu_custom_call.1
$region0: #{tpu_custom_call.1}
  #allocation0 [shape = 'u32[]', space=smem, size = 0x4, offset = 0x4, fixed_abs, tag = 'smem constant byte address 0x4 - core index']
  #allocation1 [shape = 'u32[144,128]{1,0:T(1,128)}', space=vmem, size = 0x12000, scoped, tag = 'internal scratch']
  %s0 = inlined_call_operand.vmem [shape: bf16[1,4,19], index: 0, kind: input, shape index: {}]
  %s1 = inlined_call_operand.vmem [shape: bf16[1,4,19], index: 1, kind: input, shape index: {}]
  %s2 = inlined_call_operand.vmem [shape: bf16[3,8,4], index: 2, kind: input, shape index: {}]
  %s3 = inlined_call_operand.vmem [shape: f32[8,1], index: 3, kind: input, shape index: {}]
  %s4 = inlined_call_operand.vmem [shape: f32[8,1], index: 4, kind: input, shape index: {}]
  %s5 = inlined_call_operand.vmem [shape: f32[8,1], index: 5, kind: input, shape index: {}]
  %s6 = inlined_call_operand.hbm [shape: f32[1,8,18], index: 6, kind: output, shape index: {}]
  %s7 = sld [smem:[#allocation0]]
  $region34: #{tpu_custom_call.1} parent=0
    _
  %s9 = ssub.s32 1, %s7
  %s10 = scalar_select 0, %s9, %s7
  $region1: #{tpu_custom_call.1} parent=0
    #allocation2 [shape = 'u8[4096]{0}', space=vmem, size = 0x1000, scoped, tag = 'output window, operand 0, single buffered']
    #allocation3 [shape = 's32[1]{0}', space=sflag, size = 0x4, scoped, tag = 'scoped memory for tpu_custom_call.1']
    %11 = vsyncpa [#allocation3], 0
    // Predicated region
    $region2: #{tpu_custom_call.1} parent=1 // pred_check
      _
    $region3: #{tpu_custom_call.1} parent=1 // pred_check_branch
      %13 = sbr.rel (0) target = $region5
    $region4: #{tpu_custom_call.1} parent=1 // pred_region
      _
    $region5: #{tpu_custom_call.1} parent=1 // pred_fallthru
      _
    // Predicated region
    $region6: #{tpu_custom_call.1} parent=1 // pred_check
      _
    $region7: #{tpu_custom_call.1} parent=1 // pred_check_branch
      %15 = sbr.rel (0) target = $region9
    $region8: #{tpu_custom_call.1} parent=1 // pred_region
      _
    $region9: #{tpu_custom_call.1} parent=1 // pred_fallthru
      _
    // Predicated region
    $region10: #{tpu_custom_call.1} parent=1 // pred_check
      _
    $region11: #{tpu_custom_call.1} parent=1 // pred_check_branch
      %17 = sbr.rel (0) target = $region13
    $region12: #{tpu_custom_call.1} parent=1 // pred_region
      _
    $region13: #{tpu_custom_call.1} parent=1 // pred_fallthru
      _
    // Predicated region
    $region14: #{tpu_custom_call.1} parent=1 // pred_check
      _
    $region15: #{tpu_custom_call.1} parent=1 // pred_check_branch
      %19 = sbr.rel (0) target = $region17
    $region16: #{tpu_custom_call.1} parent=1 // pred_region
      _
    $region17: #{tpu_custom_call.1} parent=1 // pred_fallthru
      _
    // Predicated region
    $region18: #{tpu_custom_call.1} parent=1 // pred_check
      _
    $region19: #{tpu_custom_call.1} parent=1 // pred_check_branch
      %21 = sbr.rel (0) target = $region21
    $region20: #{tpu_custom_call.1} parent=1 // pred_region
      _
    $region21: #{tpu_custom_call.1} parent=1 // pred_fallthru
      _
    // Predicated region
    $region22: #{tpu_custom_call.1} parent=1 // pred_check
      _
    $region23: #{tpu_custom_call.1} parent=1 // pred_check_branch
      %23 = sbr.rel (0) target = $region25
    $region24: #{tpu_custom_call.1} parent=1 // pred_region
      _
    $region25: #{tpu_custom_call.1} parent=1 // pred_fallthru
      _
    %v25 = vld [vmem:[%s2] sm:$0xf]
    %v26 = vld [vmem:[%s0] sm:$0x3]
    %v27 = vld [vmem:[%s1] sm:$0x3]
    %s28 = scalar_lea.vmem %s2, 4
    %v29 = vld [vmem:[%s28] sm:$0xf]
    %vm30 = vcmask 31744
    %v32 = vsel %vm30, %v29, 0
    %vm34 = vcmask 1041408
    %v36 = vsel %vm34, %v27, 0
    %38 = vmatprep.subr.bf16.mxu0 0
    %39 = vmatpush1.bf16.msra.mxu0 %v36
    %40 = vmatprep.subr.bf16.mxu0 0
    %41 = vmatpush1.bf16.msra.mxu0 0
    %42 = vmatprep.subr.bf16.mxu0 0
    %43 = vmatpush1.bf16.msra.mxu0 0
    %44 = vmatprep.subr.bf16.mxu0 0
    %45 = vmatpush1.bf16.msra.mxu0 0
    %46 = vmatprep.subr.bf16.mxu0 0
    %47 = vmatpush1.bf16.msra.mxu0 0
    %48 = vmatprep.subr.bf16.mxu0 0
    %49 = vmatpush1.bf16.msra.mxu0 0
    %50 = vmatprep.subr.bf16.mxu0 0
    %51 = vmatpush1.bf16.msra.mxu0 0
    %52 = vmatprep.subr.bf16.mxu0 0
    %53 = vmatpush1.bf16.msra.mxu0 0
    %54 = vmatprep.subr.bf16.mxu0 0
    %55 = vmatpush1.bf16.msra.mxu0 0
    %56 = vmatprep.subr.bf16.mxu0 0
    %57 = vmatpush1.bf16.msra.mxu0 0
    %58 = vmatprep.subr.bf16.mxu0 0
    %59 = vmatpush1.bf16.msra.mxu0 0
    %60 = vmatprep.subr.bf16.mxu0 0
    %61 = vmatpush1.bf16.msra.mxu0 0
    %62 = vmatprep.subr.bf16.mxu0 0
    %63 = vmatpush1.bf16.msra.mxu0 0
    %64 = vmatprep.subr.bf16.mxu0 0
    %65 = vmatpush1.bf16.msra.mxu0 0
    %66 = vmatprep.subr.bf16.mxu0 0
    %67 = vmatpush1.bf16.msra.mxu0 0
    %68 = vmatprep.subr.bf16.mxu0 0
    %69 = vmatpush1.bf16.msra.mxu0 0
    %70 = vmatprep.mubr.bf16.mxu0 0
    %71 = vmatmul.mubr.bf16.gmra.mrb[0].mxu0 %v32
    %v72 = vpop.f32.mrb[0].mxu0
    %v73 = vadd.f32 0.0, %v72
    %v74 = vpop.f32.mrb[0].mxu0
    %v75 = vpop.f32.mrb[0].mxu0
    %v76 = vpop.f32.mrb[0].mxu0
    %77 = vdwg.mxu0
    %v79 = vsel %vm30, %v25, 0
    %v82 = vsel %vm34, %v26, 0
    %84 = vmatprep.subr.bf16.mxu0 0
    %85 = vmatpush1.bf16.msra.mxu0 %v82
    %86 = vmatprep.subr.bf16.mxu0 0
    %87 = vmatpush1.bf16.msra.mxu0 0
    %88 = vmatprep.subr.bf16.mxu0 0
    %89 = vmatpush1.bf16.msra.mxu0 0
    %90 = vmatprep.subr.bf16.mxu0 0
    %91 = vmatpush1.bf16.msra.mxu0 0
    %92 = vmatprep.subr.bf16.mxu0 0
    %93 = vmatpush1.bf16.msra.mxu0 0
    %94 = vmatprep.subr.bf16.mxu0 0
    %95 = vmatpush1.bf16.msra.mxu0 0
    %96 = vmatprep.subr.bf16.mxu0 0
    %97 = vmatpush1.bf16.msra.mxu0 0
    %98 = vmatprep.subr.bf16.mxu0 0
    %99 = vmatpush1.bf16.msra.mxu0 0
    %100 = vmatprep.subr.bf16.mxu0 0
    %101 = vmatpush1.bf16.msra.mxu0 0
    %102 = vmatprep.subr.bf16.mxu0 0
    %103 = vmatpush1.bf16.msra.mxu0 0
    %104 = vmatprep.subr.bf16.mxu0 0
    %105 = vmatpush1.bf16.msra.mxu0 0
    %106 = vmatprep.subr.bf16.mxu0 0
    %107 = vmatpush1.bf16.msra.mxu0 0
    %108 = vmatprep.subr.bf16.mxu0 0
    %109 = vmatpush1.bf16.msra.mxu0 0
    %110 = vmatprep.subr.bf16.mxu0 0
    %111 = vmatpush1.bf16.msra.mxu0 0
    %112 = vmatprep.subr.bf16.mxu0 0
    %113 = vmatpush1.bf16.msra.mxu0 0
    %114 = vmatprep.subr.bf16.mxu0 0
    %115 = vmatpush1.bf16.msra.mxu0 0
    %116 = vmatprep.mubr.bf16.mxu0 0
    %117 = vmatmul.mubr.bf16.gmra.mrb[0].mxu0 %v79
    %v118 = vpop.f32.mrb[0].mxu0
    %v119 = vadd.f32 %v73, %v118
    %v120 = vpop.f32.mrb[0].mxu0
    %v121 = vpop.f32.mrb[0].mxu0
    %v122 = vpop.f32.mrb[0].mxu0
    %123 = vdwg.mxu0
    %v126 = vunpack.c.l.s4 1983009808
    %v127 = vunpack.c.0.s8 %v126
    %v128 = vlaneseq
    %v129 = vshrl.u32 %v128, 7
    %v130 = vsub.s32 %v127, %v129
    %v131 = vrot.slane %v26, %v130
    %132 = vrot.lane.b32.xlu0 %v131, 127
    %v133 = vpop.permute.xlu0 %132
    %v135 = vsel %vm34, %v133, 0
    %137 = vmatprep.subr.bf16.mxu0 0
    %138 = vmatpush1.bf16.msra.mxu0 %v135
    %139 = vmatprep.subr.bf16.mxu0 0
    %140 = vmatpush1.bf16.msra.mxu0 0
    %141 = vmatprep.subr.bf16.mxu0 0
    %142 = vmatpush1.bf16.msra.mxu0 0
    %143 = vmatprep.subr.bf16.mxu0 0
    %144 = vmatpush1.bf16.msra.mxu0 0
    %145 = vmatprep.subr.bf16.mxu0 0
    %146 = vmatpush1.bf16.msra.mxu0 0
    %147 = vmatprep.subr.bf16.mxu0 0
    %148 = vmatpush1.bf16.msra.mxu0 0
    %149 = vmatprep.subr.bf16.mxu0 0
    %150 = vmatpush1.bf16.msra.mxu0 0
    %151 = vmatprep.subr.bf16.mxu0 0
    %152 = vmatpush1.bf16.msra.mxu0 0
    %153 = vmatprep.subr.bf16.mxu0 0
    %154 = vmatpush1.bf16.msra.mxu0 0
    %155 = vmatprep.subr.bf16.mxu0 0
    %156 = vmatpush1.bf16.msra.mxu0 0
    %157 = vmatprep.subr.bf16.mxu0 0
    %158 = vmatpush1.bf16.msra.mxu0 0
    %159 = vmatprep.subr.bf16.mxu0 0
    %160 = vmatpush1.bf16.msra.mxu0 0
    %161 = vmatprep.subr.bf16.mxu0 0
    %162 = vmatpush1.bf16.msra.mxu0 0
    %163 = vmatprep.subr.bf16.mxu0 0
    %164 = vmatpush1.bf16.msra.mxu0 0
    %165 = vmatprep.subr.bf16.mxu0 0
    %166 = vmatpush1.bf16.msra.mxu0 0
    %167 = vmatprep.subr.bf16.mxu0 0
    %168 = vmatpush1.bf16.msra.mxu0 0
    %169 = vmatprep.mubr.bf16.mxu0 0
    %170 = vmatmul.mubr.bf16.gmra.mrb[0].mxu0 %v32
    %v171 = vpop.f32.mrb[0].mxu0
    %v172 = vadd.f32 0.0, %v171
    %v173 = vpop.f32.mrb[0].mxu0
    %v174 = vpop.f32.mrb[0].mxu0
    %v175 = vpop.f32.mrb[0].mxu0
    %176 = vdwg.mxu0
    %177 = vmatprep.subr.bf16.mxu0 0
    %178 = vmatpush1.bf16.msra.mxu0 %v36
    %179 = vmatprep.subr.bf16.mxu0 0
    %180 = vmatpush1.bf16.msra.mxu0 0
    %181 = vmatprep.subr.bf16.mxu0 0
    %182 = vmatpush1.bf16.msra.mxu0 0
    %183 = vmatprep.subr.bf16.mxu0 0
    %184 = vmatpush1.bf16.msra.mxu0 0
    %185 = vmatprep.subr.bf16.mxu0 0
    %186 = vmatpush1.bf16.msra.mxu0 0
    %187 = vmatprep.subr.bf16.mxu0 0
    %188 = vmatpush1.bf16.msra.mxu0 0
    %189 = vmatprep.subr.bf16.mxu0 0
    %190 = vmatpush1.bf16.msra.mxu0 0
    %191 = vmatprep.subr.bf16.mxu0 0
    %192 = vmatpush1.bf16.msra.mxu0 0
    %193 = vmatprep.subr.bf16.mxu0 0
    %194 = vmatpush1.bf16.msra.mxu0 0
    %195 = vmatprep.subr.bf16.mxu0 0
    %196 = vmatpush1.bf16.msra.mxu0 0
    %197 = vmatprep.subr.bf16.mxu0 0
    %198 = vmatpush1.bf16.msra.mxu0 0
    %199 = vmatprep.subr.bf16.mxu0 0
    %200 = vmatpush1.bf16.msra.mxu0 0
    %201 = vmatprep.subr.bf16.mxu0 0
    %202 = vmatpush1.bf16.msra.mxu0 0
    %203 = vmatprep.subr.bf16.mxu0 0
    %204 = vmatpush1.bf16.msra.mxu0 0
    %205 = vmatprep.subr.bf16.mxu0 0
    %206 = vmatpush1.bf16.msra.mxu0 0
    %207 = vmatprep.subr.bf16.mxu0 0
    %208 = vmatpush1.bf16.msra.mxu0 0
    %209 = vmatprep.mubr.bf16.mxu0 0
    %210 = vmatmul.mubr.bf16.gmra.mrb[0].mxu0 %v79
    %v211 = vpop.f32.mrb[0].mxu0
    %v212 = vadd.f32 %v172, %v211
    %v213 = vpop.f32.mrb[0].mxu0
    %v214 = vpop.f32.mrb[0].mxu0
    %v215 = vpop.f32.mrb[0].mxu0
    %216 = vdwg.mxu0
    %s217 = scalar_lea.vmem %s2, 8
    %v218 = vld [vmem:[%s217] sm:$0xf]
    %v220 = vsel %vm30, %v218, 0
    %222 = vmatprep.subr.bf16.mxu0 0
    %223 = vmatpush1.bf16.msra.mxu0 %v135
    %224 = vmatprep.subr.bf16.mxu0 0
    %225 = vmatpush1.bf16.msra.mxu0 0
    %226 = vmatprep.subr.bf16.mxu0 0
    %227 = vmatpush1.bf16.msra.mxu0 0
    %228 = vmatprep.subr.bf16.mxu0 0
    %229 = vmatpush1.bf16.msra.mxu0 0
    %230 = vmatprep.subr.bf16.mxu0 0
    %231 = vmatpush1.bf16.msra.mxu0 0
    %232 = vmatprep.subr.bf16.mxu0 0
    %233 = vmatpush1.bf16.msra.mxu0 0
    %234 = vmatprep.subr.bf16.mxu0 0
    %235 = vmatpush1.bf16.msra.mxu0 0
    %236 = vmatprep.subr.bf16.mxu0 0
    %237 = vmatpush1.bf16.msra.mxu0 0
    %238 = vmatprep.subr.bf16.mxu0 0
    %239 = vmatpush1.bf16.msra.mxu0 0
    %240 = vmatprep.subr.bf16.mxu0 0
    %241 = vmatpush1.bf16.msra.mxu0 0
    %242 = vmatprep.subr.bf16.mxu0 0
    %243 = vmatpush1.bf16.msra.mxu0 0
    %244 = vmatprep.subr.bf16.mxu0 0
    %245 = vmatpush1.bf16.msra.mxu0 0
    %246 = vmatprep.subr.bf16.mxu0 0
    %247 = vmatpush1.bf16.msra.mxu0 0
    %248 = vmatprep.subr.bf16.mxu0 0
    %249 = vmatpush1.bf16.msra.mxu0 0
    %250 = vmatprep.subr.bf16.mxu0 0
    %251 = vmatpush1.bf16.msra.mxu0 0
    %252 = vmatprep.subr.bf16.mxu0 0
    %253 = vmatpush1.bf16.msra.mxu0 0
    %254 = vmatprep.mubr.bf16.mxu0 0
    %255 = vmatmul.mubr.bf16.gmra.mrb[0].mxu0 %v220
    %v256 = vpop.f32.mrb[0].mxu0
    %v257 = vadd.f32 0.0, %v256
    %v258 = vpop.f32.mrb[0].mxu0
    %v259 = vpop.f32.mrb[0].mxu0
    %v260 = vpop.f32.mrb[0].mxu0
    %261 = vdwg.mxu0
    %v262 = vadd.f32 %v119, %v257
    %v263 = vld [vmem:[%s1] sm:$0x3]
    %v266 = vunpack.c.l.s4 1983009808
    %v267 = vunpack.c.0.s8 %v266
    %v268 = vlaneseq
    %v269 = vshrl.u32 %v268, 7
    %v270 = vsub.s32 %v267, %v269
    %v271 = vrot.slane %v263, %v270
    %272 = vrot.lane.b32.xlu0 %v271, 127
    %v273 = vpop.permute.xlu0 %272
    %v275 = vsel %vm34, %v273, 0
    %277 = vmatprep.subr.bf16.mxu0 0
    %278 = vmatpush1.bf16.msra.mxu0 %v275
    %279 = vmatprep.subr.bf16.mxu0 0
    %280 = vmatpush1.bf16.msra.mxu0 0
    %281 = vmatprep.subr.bf16.mxu0 0
    %282 = vmatpush1.bf16.msra.mxu0 0
    %283 = vmatprep.subr.bf16.mxu0 0
    %284 = vmatpush1.bf16.msra.mxu0 0
    %285 = vmatprep.subr.bf16.mxu0 0
    %286 = vmatpush1.bf16.msra.mxu0 0
    %287 = vmatprep.subr.bf16.mxu0 0
    %288 = vmatpush1.bf16.msra.mxu0 0
    %289 = vmatprep.subr.bf16.mxu0 0
    %290 = vmatpush1.bf16.msra.mxu0 0
    %291 = vmatprep.subr.bf16.mxu0 0
    %292 = vmatpush1.bf16.msra.mxu0 0
    %293 = vmatprep.subr.bf16.mxu0 0
    %294 = vmatpush1.bf16.msra.mxu0 0
    %295 = vmatprep.subr.bf16.mxu0 0
    %296 = vmatpush1.bf16.msra.mxu0 0
    %297 = vmatprep.subr.bf16.mxu0 0
    %298 = vmatpush1.bf16.msra.mxu0 0
    %299 = vmatprep.subr.bf16.mxu0 0
    %300 = vmatpush1.bf16.msra.mxu0 0
    %301 = vmatprep.subr.bf16.mxu0 0
    %302 = vmatpush1.bf16.msra.mxu0 0
    %303 = vmatprep.subr.bf16.mxu0 0
    %304 = vmatpush1.bf16.msra.mxu0 0
    %305 = vmatprep.subr.bf16.mxu0 0
    %306 = vmatpush1.bf16.msra.mxu0 0
    %307 = vmatprep.subr.bf16.mxu0 0
    %308 = vmatpush1.bf16.msra.mxu0 0
    %309 = vmatprep.mubr.bf16.mxu0 0
    %310 = vmatmul.mubr.bf16.gmra.mrb[0].mxu0 %v220
    %v311 = vpop.f32.mrb[0].mxu0
    %v312 = vadd.f32 0.0, %v311
    %v313 = vpop.f32.mrb[0].mxu0
    %v314 = vpop.f32.mrb[0].mxu0
    %v315 = vpop.f32.mrb[0].mxu0
    %316 = vdwg.mxu0
    %v317 = vadd.f32 %v212, %v312
    %v318 = vld [vmem:[%s3] sm:$0xff]
    %320 = vset.pattern.permute.xlu0 0
    %321 = vperm.xlu0 %320, %v318
    %v322 = vpop.permute.xlu0 %321
    %v324 = vadd.f32 %v262, %v322
    %v325 = vmax.f32 %v324, 0.0
    %v326 = vadd.f32 %v317, %v322
    %v327 = vmax.f32 %v326, 0.0
    %v328 = vadd.f32 %v325, %v327
    %v329 = vld [vmem:[%s4] sm:$0xff]
    %331 = vset.pattern.permute.xlu0 0
    %332 = vperm.xlu0 %331, %v329
    %v333 = vpop.permute.xlu0 %332
    %v335 = vmul.f32 %v333, %v328
    %v336 = vld [vmem:[%s5] sm:$0xff]
    %338 = vset.pattern.permute.xlu0 0
    %339 = vperm.xlu0 %338, %v336
    %v340 = vpop.permute.xlu0 %339
    %v342 = vadd.f32 %v335, %v340
    %vm343 = vcmask 146432
    %344 = vst.msk [vmem:[#allocation2] sm:$0xff] %vm343, %v342
    // Predicated region
    $region26: #{tpu_custom_call.1} parent=1 // pred_check
      _
    $region27: #{tpu_custom_call.1} parent=1 // pred_check_branch
      %346 = sbr.rel (0) target = $region29
    $region28: #{tpu_custom_call.1} parent=1 // pred_region
      %s348 = ssub.s32 128, 128
      %349 = vsyncadd [#allocation3], %s348
      %s351 = sshll.u32 [#allocation2], 4
      %s352 = int_to_ptr.vmem [resolvable:$true] %s351
      %354 = dma.vmem_to_hbm [thread:$0]  %s352, 128, %s6, [#allocation3]
    $region29: #{tpu_custom_call.1} parent=1 // pred_fallthru
      _
    // Predicated region
    $region30: #{tpu_custom_call.1} parent=1 // pred_check
      _
    $region31: #{tpu_custom_call.1} parent=1 // pred_check_branch
      %356 = sbr.rel (0) target = $region33
    $region32: #{tpu_custom_call.1} parent=1 // pred_region
      %357 = dma.done [#allocation3], 128
    $region33: #{tpu_custom_call.1} parent=1 // pred_fallthru
      _
    %358 = vsyncpa [#allocation3], 1

</llo_original>
